<compile_context>
chip_gen: v5e
topology: v5e:2x2
jax: 0.10.0
libtpu: 0.0.40
codegen_flags: <defaults>
</compile_context>

<pallas_src>
import numpy as np
import jax
import jax.numpy as jnp
from jax.experimental import pallas as pl
from jax.experimental.pallas import tpu as pltpu


# ----------------------------------------------------------------------------
# Fused Pallas kernel: D fwd (fake+real) -> loss_d -> grad -> SGD -> loss_g
# ----------------------------------------------------------------------------
def _fused_gan_kernel(xf_ref, xr_ref, wt_ref, b_ref, lr_ref,
                      loss_d_ref, loss_g_ref, wt_new_ref, b_new_ref):
    xf = xf_ref[...]                      # (B, F)  detached fake, flattened
    xr = xr_ref[...]                      # (B, F)  detached real, flattened
    wt = wt_ref[...]                      # (1, F)  lane-dense transposed weight
    b = b_ref[0, 0]                       # scalar bias (SMEM)
    lr = lr_ref[0, 0]                     # scalar learning rate (SMEM)

    B = xf.shape[0]                       # static
    inv_n = jnp.float32(1.0 / B)          # d_fake / d_real both have B*1 elements

    # --- Discriminator forward: d = x @ W + b  (W = wt^T).  VPU multiply +
    #     XLU lane reduce; MXU would be badly under-utilized for N=1.
    d_f = jnp.sum(xf * wt, axis=1, keepdims=True) + b     # (B, 1)
    d_r = jnp.sum(xr * wt, axis=1, keepdims=True) + b     # (B, 1)

    s_f = jax.nn.sigmoid(d_f)
    s_r = jax.nn.sigmoid(d_r)

    # --- 'GAN' branch of the reference (targets intentionally as written):
    #       real_loss = BCE(sigmoid(d_real), zeros)
    #       fake_loss = BCE(sigmoid(d_fake), ones)
    #       loss_d    = -(real_loss + fake_loss)
    #     nn.BCELoss clamps the log terms at -100 (PyTorch semantics).
    fake_loss = -jnp.mean(jnp.maximum(jnp.log(s_f), -100.0))
    real_loss = -jnp.mean(jnp.maximum(jnp.log(1.0 - s_r), -100.0))
    loss_d_ref[0, 0] = -(real_loss + fake_loss)

    # --- Analytic grads of loss_d w.r.t. the scores (clamp treated as
    #     pass-through where inactive, matching the float64 reference below).
    g_f = (1.0 - s_f) * inv_n             # d loss_d / d d_fake  (B, 1)
    g_r = -s_r * inv_n                    # d loss_d / d d_real  (B, 1)

    # --- grad_W^T = g^T @ X, computed as a lane-dense (1, F) row via a tiny
    #     sublane reduce (B rows) — no transpose of X, no (F, 1) masked stores.
    gwt = (jnp.sum(g_f * xf, axis=0, keepdims=True)
           + jnp.sum(g_r * xr, axis=0, keepdims=True))    # (1, F)
    gb = jnp.sum(g_f) + jnp.sum(g_r)

    # --- D_optim.step(): plain SGD fused into the epilogue.  wt_new aliases
    #     wt in HBM (input_output_aliases), so W is read+written exactly once.
    wt_new = wt - lr * gwt
    b_new = b - lr * gb
    wt_new_ref[...] = wt_new
    b_new_ref[0, 0] = b_new

    # --- Generator loss with the *updated* discriminator.  fake (non-detached)
    #     is numerically identical to fake.detach(), so xf is reused (no extra
    #     HBM read).
    d_g = jnp.sum(xf * wt_new, axis=1, keepdims=True) + b_new
    loss_g_ref[0, 0] = -jnp.mean(jnp.maximum(jnp.log(jax.nn.sigmoid(d_g)), -100.0))


def fused_adversarial_step(xf, xr, wt, b, lr):
    """One fused call. Returns (loss_d, loss_g, Wt_new, b_new)."""
    B, F = xf.shape
    assert xr.shape == (B, F)
    assert wt.shape == (1, F)
    lr_arr = jnp.full((1, 1), lr, jnp.float32)

    return pl.pallas_call(
        _fused_gan_kernel,
        out_shape=(
            jax.ShapeDtypeStruct((1, 1), jnp.float32),   # loss_d
            jax.ShapeDtypeStruct((1, 1), jnp.float32),   # loss_g
            jax.ShapeDtypeStruct((1, F), jnp.float32),   # Wt_new (lane-dense)
            jax.ShapeDtypeStruct((1, 1), jnp.float32),   # b_new
        ),
        in_specs=[
            pl.BlockSpec(memory_space=pltpu.MemorySpace.VMEM),   # xf
            pl.BlockSpec(memory_space=pltpu.MemorySpace.VMEM),   # xr
            pl.BlockSpec(memory_space=pltpu.MemorySpace.VMEM),   # wt
            pl.BlockSpec(memory_space=pltpu.MemorySpace.SMEM),   # b
            pl.BlockSpec(memory_space=pltpu.MemorySpace.SMEM),   # lr
        ],
        out_specs=(
            pl.BlockSpec(memory_space=pltpu.MemorySpace.SMEM),   # loss_d
            pl.BlockSpec(memory_space=pltpu.MemorySpace.SMEM),   # loss_g
            pl.BlockSpec(memory_space=pltpu.MemorySpace.VMEM),   # Wt_new
            pl.BlockSpec(memory_space=pltpu.MemorySpace.SMEM),   # b_new
        ),
        # Fuse the SGD weight update in-place: input wt (index 2) -> output
        # Wt_new (index 2).  Saves one F*4-byte HBM read+write.
        input_output_aliases={2: 2},
        cost_estimate=pl.CostEstimate(
            flops=10 * B * F + 2 * F,
            transcendentals=6 * B,
            bytes_accessed=(2 * B * F + 2 * F) * 4,
        ),
    )(xf, xr, wt, b, lr_arr)


# ----------------------------------------------------------------------------
# Module wrapper (mirrors AdversarialLoss.forward for the 'GAN' branch)
# ----------------------------------------------------------------------------
class AdversarialLossPallas:
    def __init__(self, cfg=None, gan_type="GAN"):
        if gan_type not in ("GAN", "LSGAN", "WGAN-GP"):
            raise SystemExit(f'No such type of GAN: "{gan_type}"')
        if gan_type != "GAN":
            # TODO(synk): LSGAN / WGAN-GP branches not implemented in Pallas.
            raise NotImplementedError(gan_type)
        self.cfg = cfg or {}
        self.gan_type = gan_type

    def get_type(self):
        return self.gan_type

    def forward(self, fake, real, D_params, lr=1e-3):
        """Returns (loss_g, loss_d, updated D params).

        D is a linear discriminator (flatten -> Linear(F, 1)) whose weight is
        stored TRANSPOSED: D_params = (Wt:(1, F), b:(1, 1)).

        Mirrors the PyTorch forward:
          1) d_fake = D(fake.detach()), d_real = D(real.detach())
          2) loss_d ('GAN' branch), backward through D, D_optim.step() (SGD)
          3) d_fake_for_g = D(fake) with updated D, loss_g
        All of the above happens inside one fused Pallas kernel.
        """
        Wt, b = D_params
        assert fake.shape == real.shape, "fake/real must have identical shapes"
        B = fake.shape[0]
        F = int(np.prod(fake.shape[1:]))

        xf = jax.lax.stop_gradient(fake).reshape(B, F).astype(jnp.float32)
        xr = jax.lax.stop_gradient(real).reshape(B, F).astype(jnp.float32)

        loss_d, loss_g, Wt_new, b_new = fused_adversarial_step(xf, xr, Wt, b, lr)
        return loss_g.reshape(()), loss_d.reshape(()), (Wt_new, b_new)


# ----------------------------------------------------------------------------
# Pure-numpy reference (float64) for a sanity check
# ----------------------------------------------------------------------------
def _ref_forward(fake, real, Wd, bd, lr=1e-3):
    sig = lambda x: 1.0 / (1.0 + np.exp(-x))
    B = fake.shape[0]
    xf = np.asarray(fake, np.float64).reshape(B, -1)
    xr = np.asarray(real, np.float64).reshape(B, -1)
    W = np.asarray(Wd, np.float64)          # (F, 1)
    b = np.asarray(bd, np.float64)          # (1, 1)
    d_fake = xf @ W + b
    d_real = xr @ W + b
    s_f, s_r = sig(d_fake), sig(d_real)
    n = d_fake.size
    real_loss = -np.mean(np.maximum(np.log(1.0 - s_r), -100.0))
    fake_loss = -np.mean(np.maximum(np.log(s_f), -100.0))
    loss_d = -(real_loss + fake_loss)
    g_real = -s_r / n
    g_fake = (1.0 - s_f) / n
    gW = xf.T @ g_fake + xr.T @ g_real
    gb = (g_fake.sum() + g_real.sum()).reshape(b.shape)
    W_new, b_new = W - lr * gW, b - lr * gb
    d_g = xf @ W_new + b_new
    loss_g = -np.mean(np.maximum(np.log(sig(d_g)), -100.0))
    return loss_g, loss_d


if __name__ == "__main__":
    key = jax.random.PRNGKey(0)
    B, C, H, W = 2, 4, 16, 16
    F = C * H * W  # 1024

    kf, kr, kw = jax.random.split(key, 3)
    fake = jax.random.normal(kf, (B, C, H, W), jnp.float32)
    real = jax.random.normal(kr, (B, C, H, W), jnp.float32)

    # Deterministic linear-discriminator parameters (weight stored transposed).
    Wt = (jax.random.normal(kw, (1, F), jnp.float32) * 0.02).astype(jnp.float32)
    bd = jnp.zeros((1, 1), jnp.float32)

    # Host-side copies BEFORE the call (Wt's HBM buffer is donated to the
    # fused kernel via input_output_aliases).
    fake_np, real_np = np.asarray(fake), np.asarray(real)
    Wt_np, bd_np = np.asarray(Wt), np.asarray(bd)

    adv = AdversarialLossPallas(cfg={}, gan_type="GAN")
    loss_g, loss_d, _ = adv.forward(fake, real, (Wt, bd), lr=1e-3)
    loss_g, loss_d = jax.block_until_ready((loss_g, loss_d))

    ref_g, ref_d = _ref_forward(fake_np, real_np, Wt_np.T, bd_np, lr=1e-3)
    np.testing.assert_allclose(float(loss_g), ref_g, rtol=1e-2, atol=1e-2)
    np.testing.assert_allclose(float(loss_d), ref_d, rtol=1e-2, atol=1e-2)
    assert np.isfinite(float(loss_g)) and np.isfinite(float(loss_d))

    print("KERNEL_OK")
</pallas_src>

<mosaic_0001>
module attributes {stable_mosaic.version = 11 : i64} {
  func.func @_fused_gan_kernel(%arg0: memref<2x1024xf32, #tpu.memory_space<vmem>>, %arg1: memref<2x1024xf32, #tpu.memory_space<vmem>>, %arg2: memref<1x1024xf32, #tpu.memory_space<vmem>>, %arg3: memref<1x1xf32, #tpu.memory_space<smem>>, %arg4: memref<1x1xf32, #tpu.memory_space<smem>>, %arg5: memref<1x1xf32, #tpu.memory_space<smem>>, %arg6: memref<1x1xf32, #tpu.memory_space<smem>>, %arg7: memref<1x1024xf32, #tpu.memory_space<vmem>>, %arg8: memref<1x1xf32, #tpu.memory_space<smem>>) attributes {dimension_semantics = [], scalar_prefetch = 0 : i64, scratch_operands = 0 : i64, tpu.core_type = #tpu.core_type<tc>} {
    %c0 = arith.constant 0 : index
    %c0_0 = arith.constant 0 : index
    %0 = vector.load %arg0[%c0, %c0_0] : memref<2x1024xf32, #tpu.memory_space<vmem>>, vector<2x1024xf32>
    %c0_1 = arith.constant 0 : index
    %c0_2 = arith.constant 0 : index
    %1 = vector.load %arg1[%c0_1, %c0_2] : memref<2x1024xf32, #tpu.memory_space<vmem>>, vector<2x1024xf32>
    %c0_3 = arith.constant 0 : index
    %c0_4 = arith.constant 0 : index
    %2 = vector.load %arg2[%c0_3, %c0_4] : memref<1x1024xf32, #tpu.memory_space<vmem>>, vector<1x1024xf32>
    %c0_5 = arith.constant 0 : index
    %c0_6 = arith.constant 0 : index
    %3 = memref.load %arg3[%c0_5, %c0_6] : memref<1x1xf32, #tpu.memory_space<smem>>
    %c0_7 = arith.constant 0 : index
    %c0_8 = arith.constant 0 : index
    %4 = memref.load %arg4[%c0_7, %c0_8] : memref<1x1xf32, #tpu.memory_space<smem>>
    %5 = vector.broadcast %2 : vector<1x1024xf32> to vector<2x1024xf32>
    %6 = arith.mulf %0, %5 : vector<2x1024xf32>
    %cst = arith.constant dense<0.000000e+00> : vector<2xf32>
    %7 = vector.multi_reduction <add>, %6, %cst [1] : vector<2x1024xf32> to vector<2xf32>
    %8 = vector.shape_cast %7 : vector<2xf32> to vector<2x1xf32>
    %9 = vector.broadcast %3 : f32 to vector<2x1xf32>
    %10 = arith.addf %8, %9 : vector<2x1xf32>
    %11 = vector.broadcast %2 : vector<1x1024xf32> to vector<2x1024xf32>
    %12 = arith.mulf %1, %11 : vector<2x1024xf32>
    %cst_9 = arith.constant dense<0.000000e+00> : vector<2xf32>
    %13 = vector.multi_reduction <add>, %12, %cst_9 [1] : vector<2x1024xf32> to vector<2xf32>
    %14 = vector.shape_cast %13 : vector<2xf32> to vector<2x1xf32>
    %15 = vector.broadcast %3 : f32 to vector<2x1xf32>
    %16 = arith.addf %14, %15 : vector<2x1xf32>
    %17 = arith.negf %10 : vector<2x1xf32>
    %18 = math.exp %17 : vector<2x1xf32>
    %cst_10 = arith.constant 1.000000e+00 : f32
    %19 = vector.broadcast %cst_10 : f32 to vector<2x1xf32>
    %20 = arith.addf %19, %18 : vector<2x1xf32>
    %21 = arith.divf %19, %20 : vector<2x1xf32>
    %22 = arith.negf %16 : vector<2x1xf32>
    %23 = math.exp %22 : vector<2x1xf32>
    %cst_11 = arith.constant 1.000000e+00 : f32
    %24 = vector.broadcast %cst_11 : f32 to vector<2x1xf32>
    %25 = arith.addf %24, %23 : vector<2x1xf32>
    %26 = arith.divf %24, %25 : vector<2x1xf32>
    %27 = math.log %21 : vector<2x1xf32>
    %cst_12 = arith.constant -1.000000e+02 : f32
    %28 = vector.broadcast %cst_12 : f32 to vector<2x1xf32>
    %29 = arith.maximumf %27, %28 : vector<2x1xf32>
    %30 = vector.shape_cast %29 : vector<2x1xf32> to vector<1x2x1xf32>
    %cst_13 = arith.constant dense<0.000000e+00> : vector<1xf32>
    %31 = vector.multi_reduction <add>, %30, %cst_13 [1, 2] : vector<1x2x1xf32> to vector<1xf32>
    %32 = vector.shape_cast %31 : vector<1xf32> to vector<1x1x1xf32>
    %33 = vector.extract %32[0, 0, 0] : f32 from vector<1x1x1xf32>
    %cst_14 = arith.constant 2.000000e+00 : f32
    %34 = arith.divf %33, %cst_14 : f32
    %cst_15 = arith.constant 0.000000e+00 : f32
    %35 = arith.subf %cst_15, %34 : f32
    %cst_16 = arith.constant 1.000000e+00 : f32
    %36 = vector.broadcast %cst_16 : f32 to vector<2x1xf32>
    %37 = arith.subf %36, %26 : vector<2x1xf32>
    %38 = math.log %37 : vector<2x1xf32>
    %cst_17 = arith.constant -1.000000e+02 : f32
    %39 = vector.broadcast %cst_17 : f32 to vector<2x1xf32>
    %40 = arith.maximumf %38, %39 : vector<2x1xf32>
    %41 = vector.shape_cast %40 : vector<2x1xf32> to vector<1x2x1xf32>
    %cst_18 = arith.constant dense<0.000000e+00> : vector<1xf32>
    %42 = vector.multi_reduction <add>, %41, %cst_18 [1, 2] : vector<1x2x1xf32> to vector<1xf32>
    %43 = vector.shape_cast %42 : vector<1xf32> to vector<1x1x1xf32>
    %44 = vector.extract %43[0, 0, 0] : f32 from vector<1x1x1xf32>
    %cst_19 = arith.constant 2.000000e+00 : f32
    %45 = arith.divf %44, %cst_19 : f32
    %cst_20 = arith.constant 0.000000e+00 : f32
    %46 = arith.subf %cst_20, %45 : f32
    %47 = arith.addf %46, %35 : f32
    %cst_21 = arith.constant 0.000000e+00 : f32
    %48 = arith.subf %cst_21, %47 : f32
    %c0_22 = arith.constant 0 : index
    %c0_23 = arith.constant 0 : index
    %49 = memref.load %arg5[%c0_22, %c0_23] : memref<1x1xf32, #tpu.memory_space<smem>>
    memref.store %48, %arg5[%c0_22, %c0_23] : memref<1x1xf32, #tpu.memory_space<smem>>
    %cst_24 = arith.constant 1.000000e+00 : f32
    %50 = vector.broadcast %cst_24 : f32 to vector<2x1xf32>
    %51 = arith.subf %50, %21 : vector<2x1xf32>
    %cst_25 = arith.constant 5.000000e-01 : f32
    %52 = vector.broadcast %cst_25 : f32 to vector<2x1xf32>
    %53 = arith.mulf %51, %52 : vector<2x1xf32>
    %cst_26 = arith.constant 0.000000e+00 : f32
    %54 = vector.broadcast %cst_26 : f32 to vector<2x1xf32>
    %55 = arith.subf %54, %26 : vector<2x1xf32>
    %cst_27 = arith.constant 5.000000e-01 : f32
    %56 = vector.broadcast %cst_27 : f32 to vector<2x1xf32>
    %57 = arith.mulf %55, %56 : vector<2x1xf32>
    %58 = vector.broadcast %53 : vector<2x1xf32> to vector<2x1024xf32>
    %59 = arith.mulf %58, %0 : vector<2x1024xf32>
    %cst_28 = arith.constant dense<0.000000e+00> : vector<1024xf32>
    %60 = vector.multi_reduction <add>, %59, %cst_28 [0] : vector<2x1024xf32> to vector<1024xf32>
    %61 = vector.shape_cast %60 : vector<1024xf32> to vector<1x1024xf32>
    %62 = vector.broadcast %57 : vector<2x1xf32> to vector<2x1024xf32>
    %63 = arith.mulf %62, %1 : vector<2x1024xf32>
    %cst_29 = arith.constant dense<0.000000e+00> : vector<1024xf32>
    %64 = vector.multi_reduction <add>, %63, %cst_29 [0] : vector<2x1024xf32> to vector<1024xf32>
    %65 = vector.shape_cast %64 : vector<1024xf32> to vector<1x1024xf32>
    %66 = arith.addf %61, %65 : vector<1x1024xf32>
    %67 = vector.shape_cast %53 : vector<2x1xf32> to vector<1x2x1xf32>
    %cst_30 = arith.constant dense<0.000000e+00> : vector<1xf32>
    %68 = vector.multi_reduction <add>, %67, %cst_30 [1, 2] : vector<1x2x1xf32> to vector<1xf32>
    %69 = vector.shape_cast %68 : vector<1xf32> to vector<1x1x1xf32>
    %70 = vector.extract %69[0, 0, 0] : f32 from vector<1x1x1xf32>
    %71 = vector.shape_cast %57 : vector<2x1xf32> to vector<1x2x1xf32>
    %cst_31 = arith.constant dense<0.000000e+00> : vector<1xf32>
    %72 = vector.multi_reduction <add>, %71, %cst_31 [1, 2] : vector<1x2x1xf32> to vector<1xf32>
    %73 = vector.shape_cast %72 : vector<1xf32> to vector<1x1x1xf32>
    %74 = vector.extract %73[0, 0, 0] : f32 from vector<1x1x1xf32>
    %75 = arith.addf %70, %74 : f32
    %76 = vector.broadcast %4 : f32 to vector<1x1024xf32>
    %77 = arith.mulf %76, %66 : vector<1x1024xf32>
    %78 = arith.subf %2, %77 : vector<1x1024xf32>
    %79 = arith.mulf %4, %75 : f32
    %80 = arith.subf %3, %79 : f32
    %c0_32 = arith.constant 0 : index
    %c0_33 = arith.constant 0 : index
    %81 = vector.load %arg7[%c0_32, %c0_33] : memref<1x1024xf32, #tpu.memory_space<vmem>>, vector<1x1024xf32>
    tpu.vector_store %arg7[%c0_32, %c0_33], %78 {strides = array<i32>} : memref<1x1024xf32, #tpu.memory_space<vmem>>, vector<1x1024xf32>,
    %c0_34 = arith.constant 0 : index
    %c0_35 = arith.constant 0 : index
    %82 = memref.load %arg8[%c0_34, %c0_35] : memref<1x1xf32, #tpu.memory_space<smem>>
    memref.store %80, %arg8[%c0_34, %c0_35] : memref<1x1xf32, #tpu.memory_space<smem>>
    %83 = vector.broadcast %78 : vector<1x1024xf32> to vector<2x1024xf32>
    %84 = arith.mulf %0, %83 : vector<2x1024xf32>
    %cst_36 = arith.constant dense<0.000000e+00> : vector<2xf32>
    %85 = vector.multi_reduction <add>, %84, %cst_36 [1] : vector<2x1024xf32> to vector<2xf32>
    %86 = vector.shape_cast %85 : vector<2xf32> to vector<2x1xf32>
    %87 = vector.broadcast %80 : f32 to vector<2x1xf32>
    %88 = arith.addf %86, %87 : vector<2x1xf32>
    %89 = arith.negf %88 : vector<2x1xf32>
    %90 = math.exp %89 : vector<2x1xf32>
    %cst_37 = arith.constant 1.000000e+00 : f32
    %91 = vector.broadcast %cst_37 : f32 to vector<2x1xf32>
    %92 = arith.addf %91, %90 : vector<2x1xf32>
    %93 = arith.divf %91, %92 : vector<2x1xf32>
    %94 = math.log %93 : vector<2x1xf32>
    %cst_38 = arith.constant -1.000000e+02 : f32
    %95 = vector.broadcast %cst_38 : f32 to vector<2x1xf32>
    %96 = arith.maximumf %94, %95 : vector<2x1xf32>
    %97 = vector.shape_cast %96 : vector<2x1xf32> to vector<1x2x1xf32>
    %cst_39 = arith.constant dense<0.000000e+00> : vector<1xf32>
    %98 = vector.multi_reduction <add>, %97, %cst_39 [1, 2] : vector<1x2x1xf32> to vector<1xf32>
    %99 = vector.shape_cast %98 : vector<1xf32> to vector<1x1x1xf32>
    %100 = vector.extract %99[0, 0, 0] : f32 from vector<1x1x1xf32>
    %cst_40 = arith.constant 2.000000e+00 : f32
    %101 = arith.divf %100, %cst_40 : f32
    %cst_41 = arith.constant 0.000000e+00 : f32
    %102 = arith.subf %cst_41, %101 : f32
    %c0_42 = arith.constant 0 : index
    %c0_43 = arith.constant 0 : index
    %103 = memref.load %arg6[%c0_42, %c0_43] : memref<1x1xf32, #tpu.memory_space<smem>>
    memref.store %102, %arg6[%c0_42, %c0_43] : memref<1x1xf32, #tpu.memory_space<smem>>
    return
  }
}

</mosaic_0001>

<llo_original>
// kernel: tpu_custom_call.1
$region0: #{tpu_custom_call.1}
  #allocation0 [shape = 'u32[]', space=smem, size = 0x4, offset = 0x4, fixed_abs, tag = 'smem constant byte address 0x4 - core index']
  #allocation1 [shape = 'u32[72,128]{1,0:T(1,128)}', space=vmem, size = 0x9000, scoped, tag = 'internal scratch']
  #allocation2 [shape = 'f32[1,1]{1,0:T(1,128)S(6)}', space=smem, size = 0x200, scoped, tag = 'scoped memory for tpu_custom_call.1']
  #allocation3 [shape = 'f32[1,1]{1,0:T(1,128)S(6)}', space=smem, size = 0x200, scoped, tag = 'scoped memory for tpu_custom_call.1']
  %s0 = inlined_call_operand.vmem [shape: f32[2,1024], index: 0, kind: input, shape index: {}]
  %s1 = inlined_call_operand.hbm [shape: f32[2,1024], index: 1, kind: input, shape index: {}]
  %s2 = inlined_call_operand.hbm [shape: f32[1,1024], index: 2, kind: input, shape index: {}, may-alias: {2,7}]
  %s3 = inlined_call_operand.<no memory space> [shape: f32[1,1], index: 3, kind: input, shape index: {}]
  %s4 = inlined_call_operand.<no memory space> [shape: f32[1,1], index: 4, kind: input, shape index: {}]
  %s5 = inlined_call_operand.hbm [shape: f32[1,1], index: 5, kind: output, shape index: {0}]
  %s6 = inlined_call_operand.hbm [shape: f32[1,1], index: 6, kind: output, shape index: {1}]
  %s7 = inlined_call_operand.hbm [shape: f32[1,1024], index: 7, kind: output, shape index: {2}, may-alias: {2,7}]
  %s8 = inlined_call_operand.hbm [shape: f32[1,1], index: 8, kind: output, shape index: {3}]
  %9 = xla_tuple %s5, %s6, %s7, %s8
  %s10 = sld [smem:[#allocation0]]
  $region62: #{tpu_custom_call.1} parent=0
    _
  %s12 = ssub.s32 1, %s10
  %s13 = scalar_select 0, %s12, %s10
  %14 = sst [smem:[#allocation2]] %s3
  %15 = sst [smem:[#allocation3]] %s4
  $region1: #{tpu_custom_call.1} parent=0
    #allocation4 [shape = 'u8[8192]{0}', space=vmem, size = 0x2000, scoped, tag = 'input window, operand 1, single buffered']
    #allocation5 [shape = 's32[1]{0}', space=sflag, size = 0x4, scoped, tag = 'scoped memory for tpu_custom_call.1']
    #allocation6 [shape = 's32[1]{0}', space=sflag, size = 0x4, scoped, tag = 'scoped memory for tpu_custom_call.1']
    #allocation7 [shape = 's32[1]{0}', space=sflag, size = 0x4, scoped, tag = 'scoped memory for tpu_custom_call.1']
    #allocation8 [shape = 'u8[4096]{0}', space=vmem, size = 0x1000, scoped, tag = 'input window, operand 2, single buffered']
    #allocation9 [shape = 's32[1]{0}', space=sflag, size = 0x4, scoped, tag = 'scoped memory for tpu_custom_call.1']
    #allocation10 [shape = 'u8[512]{0}', space=smem, size = 0x200, scoped, tag = 'output window, operand 0, single buffered']
    #allocation11 [shape = 'u8[512]{0}', space=smem, size = 0x200, scoped, tag = 'output window, operand 1, single buffered']
    #allocation12 [shape = 's32[1]{0}', space=sflag, size = 0x4, scoped, tag = 'scoped memory for tpu_custom_call.1']
    #allocation13 [shape = 'u8[4096]{0}', space=vmem, size = 0x1000, scoped, tag = 'output window, operand 2, single buffered']
    #allocation14 [shape = 'u8[512]{0}', space=smem, size = 0x200, scoped, tag = 'output window, operand 3, single buffered']
    %16 = vsyncpa [#allocation5], 0
    %17 = vsyncpa [#allocation9], 0
    %18 = vsyncpa [#allocation7], 0
    %19 = vsyncpa [#allocation12], 0
    %20 = vsyncpa [#allocation6], 0
    // Predicated region
    $region2: #{tpu_custom_call.1} parent=1 // pred_check
      _
    $region3: #{tpu_custom_call.1} parent=1 // pred_check_branch
      %22 = sbr.rel (0) target = $region5
    $region4: #{tpu_custom_call.1} parent=1 // pred_region
      _
    $region5: #{tpu_custom_call.1} parent=1 // pred_fallthru
      _
    // Predicated region
    $region6: #{tpu_custom_call.1} parent=1 // pred_check
      _
    $region7: #{tpu_custom_call.1} parent=1 // pred_check_branch
      %24 = sbr.rel (0) target = $region9
    $region8: #{tpu_custom_call.1} parent=1 // pred_region
      %26 = vsyncadd [#allocation5], 0
      %s28 = sshll.u32 %s1, 4
      %s29 = int_to_ptr.hbm [resolvable:$true] %s28
      %s30 = sshll.u32 [#allocation4], 4
      %s31 = int_to_ptr.vmem [resolvable:$true] %s30
      %33 = dma.hbm_to_vmem [thread:$0]  %s29, 256, %s31, [#allocation5]
    $region9: #{tpu_custom_call.1} parent=1 // pred_fallthru
      _
    // Predicated region
    $region10: #{tpu_custom_call.1} parent=1 // pred_check
      _
    $region11: #{tpu_custom_call.1} parent=1 // pred_check_branch
      %35 = sbr.rel (0) target = $region13
    $region12: #{tpu_custom_call.1} parent=1 // pred_region
      %37 = vsyncadd [#allocation9], 0
      %s39 = sshll.u32 %s2, 4
      %s40 = int_to_ptr.hbm [resolvable:$true] %s39
      %s41 = sshll.u32 [#allocation8], 4
      %s42 = int_to_ptr.vmem [resolvable:$true] %s41
      %44 = dma.hbm_to_vmem [thread:$0]  %s40, 128, %s42, [#allocation9]
    $region13: #{tpu_custom_call.1} parent=1 // pred_fallthru
      _
    // Predicated region
    $region14: #{tpu_custom_call.1} parent=1 // pred_check
      _
    $region15: #{tpu_custom_call.1} parent=1 // pred_check_branch
      %46 = sbr.rel (0) target = $region17
    $region16: #{tpu_custom_call.1} parent=1 // pred_region
      _
    $region17: #{tpu_custom_call.1} parent=1 // pred_fallthru
      _
    // Predicated region
    $region18: #{tpu_custom_call.1} parent=1 // pred_check
      _
    $region19: #{tpu_custom_call.1} parent=1 // pred_check_branch
      %48 = sbr.rel (0) target = $region21
    $region20: #{tpu_custom_call.1} parent=1 // pred_region
      _
    $region21: #{tpu_custom_call.1} parent=1 // pred_fallthru
      _
    // Predicated region
    $region22: #{tpu_custom_call.1} parent=1 // pred_check
      _
    $region23: #{tpu_custom_call.1} parent=1 // pred_check_branch
      %50 = sbr.rel (0) target = $region25
    $region24: #{tpu_custom_call.1} parent=1 // pred_region
      %52 = dma.done [#allocation5], 256
    $region25: #{tpu_custom_call.1} parent=1 // pred_fallthru
      _
    // Predicated region
    $region26: #{tpu_custom_call.1} parent=1 // pred_check
      _
    $region27: #{tpu_custom_call.1} parent=1 // pred_check_branch
      %54 = sbr.rel (0) target = $region29
    $region28: #{tpu_custom_call.1} parent=1 // pred_region
      %56 = dma.done [#allocation9], 128
    $region29: #{tpu_custom_call.1} parent=1 // pred_fallthru
      _
    %v57 = vld [vmem:[%s0] sm:$0xff]
    %v58 = vld [vmem:[%s0 + $0x8] sm:$0xff]
    %v59 = vld [vmem:[#allocation4] sm:$0xff]
    %v60 = vld [vmem:[#allocation4 + $0x8] sm:$0xff]
    %v61 = vld [vmem:[#allocation8] sm:$0xff]
    %s62 = sld [smem:[#allocation2]]
    %s63 = sld [smem:[#allocation3]]
    %v65 = vperm.slane %v61, 0
    %v66 = vperm.slane %v61, 1
    %v67 = vperm.slane %v61, 2
    %v68 = vperm.slane %v61, 3
    %v69 = vperm.slane %v61, 4
    %v70 = vperm.slane %v61, 5
    %v71 = vperm.slane %v61, 6
    %v72 = vperm.slane %v61, 7
    %v73 = vrot.slane %v66, 6
    %v74 = vrot.slane %v67, 4
    %v75 = vrot.slane %v68, 2
    %v76 = vrot.slane %v70, 6
    %v77 = vrot.slane %v71, 4
    %v78 = vrot.slane %v72, 2
    %vm79 = vcmask 1041408
    %v80 = vsel %vm79, %v65, %v73
    %vm81 = vcmask 1045508
    %v82 = vsel %vm81, %v74, %v75
    %vm83 = vcmask 1043456
    %v84 = vsel %vm83, %v80, %v82
    %v85 = vsel %vm79, %v69, %v76
    %v86 = vsel %vm81, %v77, %v78
    %v87 = vsel %vm83, %v85, %v86
    %v90 = vmul.f32 %v57, %v84
    %v91 = vmul.f32 %v58, %v87
    %94 = vst [vmem:[#allocation1] ss:$4 sm:$0xff] %v90
    %s95 = scalar_lea.vmem [#allocation1], 32
    %96 = vst [vmem:[%s95] ss:$4 sm:$0xff] %v91
    %v97 = vld.sshfl [vmem:[#allocation1] sm:$0xff pattern:$0x73625140]
    %v98 = vld.sshfl [vmem:[#allocation1 + $0x8] sm:$0xff pattern:$0x73625140]
    %v99 = vld.sshfl [vmem:[#allocation1 + $0x10] sm:$0xff pattern:$0x73625140]
    %v100 = vld.sshfl [vmem:[#allocation1 + $0x18] sm:$0xff pattern:$0x73625140]
    %v101 = vld.sshfl [vmem:[#allocation1 + $0x20] sm:$0xff pattern:$0x73625140]
    %v102 = vld.sshfl [vmem:[#allocation1 + $0x28] sm:$0xff pattern:$0x73625140]
    %v103 = vld.sshfl [vmem:[#allocation1 + $0x30] sm:$0xff pattern:$0x73625140]
    %v104 = vld.sshfl [vmem:[#allocation1 + $0x38] sm:$0xff pattern:$0x73625140]
    %v113 = vsel %vm79, %v97, 0.0
    %v114 = vsel %vm79, %v98, 0.0
    %v115 = vadd.f32 %v113, %v114
    %v116 = vsel %vm79, %v99, 0.0
    %v117 = vadd.f32 %v115, %v116
    %v118 = vsel %vm79, %v100, 0.0
    %v119 = vadd.f32 %v117, %v118
    %v120 = vsel %vm79, %v101, 0.0
    %v121 = vadd.f32 %v119, %v120
    %v122 = vsel %vm79, %v102, 0.0
    %v123 = vadd.f32 %v121, %v122
    %v124 = vsel %vm79, %v103, 0.0
    %v125 = vadd.f32 %v123, %v124
    %v126 = vsel %vm79, %v104, 0.0
    %v127 = vadd.f32 %v125, %v126
    %128 = vadd.xlane.f32.xlu0 %v127
    %v129 = vpop.xlane.xlu0 %128
    %v130 = vstv %s62
    %v131 = vadd.f32 %v129, %v130
    %v132 = vmul.f32 %v59, %v84
    %v133 = vmul.f32 %v60, %v87
    %136 = vst [vmem:[#allocation1] ss:$4 sm:$0xff] %v132
    %s137 = scalar_lea.vmem [#allocation1], 32
    %138 = vst [vmem:[%s137] ss:$4 sm:$0xff] %v133
    %v139 = vld.sshfl [vmem:[#allocation1] sm:$0xff pattern:$0x73625140]
    %v140 = vld.sshfl [vmem:[#allocation1 + $0x8] sm:$0xff pattern:$0x73625140]
    %v141 = vld.sshfl [vmem:[#allocation1 + $0x10] sm:$0xff pattern:$0x73625140]
    %v142 = vld.sshfl [vmem:[#allocation1 + $0x18] sm:$0xff pattern:$0x73625140]
    %v143 = vld.sshfl [vmem:[#allocation1 + $0x20] sm:$0xff pattern:$0x73625140]
    %v144 = vld.sshfl [vmem:[#allocation1 + $0x28] sm:$0xff pattern:$0x73625140]
    %v145 = vld.sshfl [vmem:[#allocation1 + $0x30] sm:$0xff pattern:$0x73625140]
    %v146 = vld.sshfl [vmem:[#allocation1 + $0x38] sm:$0xff pattern:$0x73625140]
    %v155 = vsel %vm79, %v139, 0.0
    %v156 = vsel %vm79, %v140, 0.0
    %v157 = vadd.f32 %v155, %v156
    %v158 = vsel %vm79, %v141, 0.0
    %v159 = vadd.f32 %v157, %v158
    %v160 = vsel %vm79, %v142, 0.0
    %v161 = vadd.f32 %v159, %v160
    %v162 = vsel %vm79, %v143, 0.0
    %v163 = vadd.f32 %v161, %v162
    %v164 = vsel %vm79, %v144, 0.0
    %v165 = vadd.f32 %v163, %v164
    %v166 = vsel %vm79, %v145, 0.0
    %v167 = vadd.f32 %v165, %v166
    %v168 = vsel %vm79, %v146, 0.0
    %v169 = vadd.f32 %v167, %v168
    %170 = vadd.xlane.f32.xlu0 %v169
    %v171 = vpop.xlane.xlu0 %170
    %v172 = vadd.f32 %v171, %v130
    %v173 = vxor.u32 %v131, 2147483648
    %v174 = vmul.f32 %v173, 1.442695
    %v175 = vpow.pop %v174
    %v176 = vadd.f32 %v175, 1.0
    %v177 = vrcp.pop %v176
    %v178 = vmul.f32 %v176, %v177
    %v179 = vsub.f32 1.0, %v178
    %v180 = vmul.f32 %v177, %v179
    %v181 = vadd.f32 %v177, %v180
    %vm182 = vweird.f32 %v176
    %vm183 = vweird.f32 %v177
    %vm184 = vmor %vm182, %vm183
    %v185 = vsel %vm184, %v177, %v181
    %v186 = vand.u32 2147483647, %v176
    %vm187 = vcmp.eq.f32.partialorder %v186, 8.507059e+37
    %v188 = vand.u32 %v176, 2147483648
    %v189 = vor.u32 1.1754944e-38, %v188
    %v190 = vsel %vm187, %v189, %v185
    %v191 = vmul.f32 1.0, %v190
    %v192 = vxor.u32 %v172, 2147483648
    %v193 = vmul.f32 %v192, 1.442695
    %v194 = vpow.pop %v193
    %v195 = vadd.f32 %v194, 1.0
    %v196 = vrcp.pop %v195
    %v197 = vmul.f32 %v195, %v196
    %v198 = vsub.f32 1.0, %v197
    %v199 = vmul.f32 %v196, %v198
    %v200 = vadd.f32 %v196, %v199
    %vm201 = vweird.f32 %v195
    %vm202 = vweird.f32 %v196
    %vm203 = vmor %vm201, %vm202
    %v204 = vsel %vm203, %v196, %v200
    %v205 = vand.u32 2147483647, %v195
    %vm206 = vcmp.eq.f32.partialorder %v205, 8.507059e+37
    %v207 = vand.u32 %v195, 2147483648
    %v208 = vor.u32 1.1754944e-38, %v207
    %v209 = vsel %vm206, %v208, %v204
    %v210 = vmul.f32 1.0, %v209
    %v211 = vlog2.pop %v191
    %v212 = vmul.f32 %v211, 0.6931472
    %v213 = vmax.f32 %v212, -100.0
    %vm214 = vcmask 1024
    %v215 = vsel %vm214, %v213, 0.0
    %216 = vadd.xlane.f32.xlu0 %v215
    %v217 = vpop.xlane.xlu0 %216
    %v218 = vrot.slane %v217, 4
    %v219 = vadd.f32 %v217, %v218
    %v220 = vrot.slane %v219, 2
    %v221 = vadd.f32 %v219, %v220
    %v222 = vrot.slane %v221, 1
    %v223 = vadd.f32 %v221, %v222
    %s224 = vtos %v223
    %v225 = vrcp.pop 2.0
    %v226 = vmul.f32 2.0, %v225
    %v227 = vsub.f32 1.0, %v226
    %v228 = vmul.f32 %v225, %v227
    %v229 = vadd.f32 %v225, %v228
    %vm230 = vweird.f32 %v225
    %v231 = vsel %vm230, %v225, %v229
    %s232 = vtos %v231
    %s233 = smul.f32 %s224, %s232
    %s234 = ssub.f32 0.0, %s233
    %v235 = vsub.f32 1.0, %v210
    %v236 = vlog2.pop %v235
    %v237 = vmul.f32 %v236, 0.6931472
    %v238 = vmax.f32 %v237, -100.0
    %v239 = vsel %vm214, %v238, 0.0
    %240 = vadd.xlane.f32.xlu0 %v239
    %v241 = vpop.xlane.xlu0 %240
    %v242 = vrot.slane %v241, 4
    %v243 = vadd.f32 %v241, %v242
    %v244 = vrot.slane %v243, 2
    %v245 = vadd.f32 %v243, %v244
    %v246 = vrot.slane %v245, 1
    %v247 = vadd.f32 %v245, %v246
    %s248 = vtos %v247
    %v249 = vrcp.pop 2.0
    %v250 = vmul.f32 2.0, %v249
    %v251 = vsub.f32 1.0, %v250
    %v252 = vmul.f32 %v249, %v251
    %v253 = vadd.f32 %v249, %v252
    %vm254 = vweird.f32 %v249
    %v255 = vsel %vm254, %v249, %v253
    %s256 = vtos %v255
    %s257 = smul.f32 %s248, %s256
    %s258 = ssub.f32 0.0, %s257
    %s259 = sadd.f32 %s258, %s234
    %s260 = ssub.f32 0.0, %s259
    %s261 = scalar_lea.smem [#allocation10], 0
    %262 = sst [smem:[%s261]] %s260
    %v263 = vsub.f32 1.0, %v191
    %v264 = vmul.f32 %v263, 0.5
    %v265 = vsub.f32 0.0, %v210
    %v266 = vmul.f32 %v265, 0.5
    %269 = vst [vmem:[#allocation1] ss:$4 sm:$0xff] %v57
    %s270 = scalar_lea.vmem [#allocation1], 32
    %271 = vst [vmem:[%s270] ss:$4 sm:$0xff] %v58
    %v272 = vld.sshfl [vmem:[#allocation1] sm:$0xff pattern:$0x73625140]
    %v273 = vld.sshfl [vmem:[#allocation1 + $0x8] sm:$0xff pattern:$0x73625140]
    %v274 = vld.sshfl [vmem:[#allocation1 + $0x10] sm:$0xff pattern:$0x73625140]
    %v275 = vld.sshfl [vmem:[#allocation1 + $0x18] sm:$0xff pattern:$0x73625140]
    %v276 = vld.sshfl [vmem:[#allocation1 + $0x20] sm:$0xff pattern:$0x73625140]
    %v277 = vld.sshfl [vmem:[#allocation1 + $0x28] sm:$0xff pattern:$0x73625140]
    %v278 = vld.sshfl [vmem:[#allocation1 + $0x30] sm:$0xff pattern:$0x73625140]
    %v279 = vld.sshfl [vmem:[#allocation1 + $0x38] sm:$0xff pattern:$0x73625140]
    %v288 = vmul.f32 %v264, %v272
    %v289 = vmul.f32 %v264, %v273
    %v290 = vmul.f32 %v264, %v274
    %v291 = vmul.f32 %v264, %v275
    %v292 = vmul.f32 %v264, %v276
    %v293 = vmul.f32 %v264, %v277
    %v294 = vmul.f32 %v264, %v278
    %v295 = vmul.f32 %v264, %v279
    %v296 = vsel %vm79, %v288, 0.0
    %v297 = vrot.slane %v296, 4
    %v298 = vadd.f32 %v296, %v297
    %v299 = vrot.slane %v298, 2
    %v300 = vadd.f32 %v298, %v299
    %v301 = vrot.slane %v300, 1
    %v302 = vadd.f32 %v300, %v301
    %v303 = vsel %vm79, %v289, 0.0
    %v304 = vrot.slane %v303, 4
    %v305 = vadd.f32 %v303, %v304
    %v306 = vrot.slane %v305, 2
    %v307 = vadd.f32 %v305, %v306
    %v308 = vrot.slane %v307, 1
    %v309 = vadd.f32 %v307, %v308
    %v310 = vsel %vm79, %v290, 0.0
    %v311 = vrot.slane %v310, 4
    %v312 = vadd.f32 %v310, %v311
    %v313 = vrot.slane %v312, 2
    %v314 = vadd.f32 %v312, %v313
    %v315 = vrot.slane %v314, 1
    %v316 = vadd.f32 %v314, %v315
    %v317 = vsel %vm79, %v291, 0.0
    %v318 = vrot.slane %v317, 4
    %v319 = vadd.f32 %v317, %v318
    %v320 = vrot.slane %v319, 2
    %v321 = vadd.f32 %v319, %v320
    %v322 = vrot.slane %v321, 1
    %v323 = vadd.f32 %v321, %v322
    %v324 = vsel %vm79, %v292, 0.0
    %v325 = vrot.slane %v324, 4
    %v326 = vadd.f32 %v324, %v325
    %v327 = vrot.slane %v326, 2
    %v328 = vadd.f32 %v326, %v327
    %v329 = vrot.slane %v328, 1
    %v330 = vadd.f32 %v328, %v329
    %v331 = vsel %vm79, %v293, 0.0
    %v332 = vrot.slane %v331, 4
    %v333 = vadd.f32 %v331, %v332
    %v334 = vrot.slane %v333, 2
    %v335 = vadd.f32 %v333, %v334
    %v336 = vrot.slane %v335, 1
    %v337 = vadd.f32 %v335, %v336
    %v338 = vsel %vm79, %v294, 0.0
    %v339 = vrot.slane %v338, 4
    %v340 = vadd.f32 %v338, %v339
    %v341 = vrot.slane %v340, 2
    %v342 = vadd.f32 %v340, %v341
    %v343 = vrot.slane %v342, 1
    %v344 = vadd.f32 %v342, %v343
    %v345 = vsel %vm79, %v295, 0.0
    %v346 = vrot.slane %v345, 4
    %v347 = vadd.f32 %v345, %v346
    %v348 = vrot.slane %v347, 2
    %v349 = vadd.f32 %v347, %v348
    %v350 = vrot.slane %v349, 1
    %v351 = vadd.f32 %v349, %v350
    %354 = vst [vmem:[#allocation1] ss:$4 sm:$0xff] %v59
    %s355 = scalar_lea.vmem [#allocation1], 32
    %356 = vst [vmem:[%s355] ss:$4 sm:$0xff] %v60
    %v357 = vld.sshfl [vmem:[#allocation1] sm:$0xff pattern:$0x73625140]
    %v358 = vld.sshfl [vmem:[#allocation1 + $0x8] sm:$0xff pattern:$0x73625140]
    %v359 = vld.sshfl [vmem:[#allocation1 + $0x10] sm:$0xff pattern:$0x73625140]
    %v360 = vld.sshfl [vmem:[#allocation1 + $0x18] sm:$0xff pattern:$0x73625140]
    %v361 = vld.sshfl [vmem:[#allocation1 + $0x20] sm:$0xff pattern:$0x73625140]
    %v362 = vld.sshfl [vmem:[#allocation1 + $0x28] sm:$0xff pattern:$0x73625140]
    %v363 = vld.sshfl [vmem:[#allocation1 + $0x30] sm:$0xff pattern:$0x73625140]
    %v364 = vld.sshfl [vmem:[#allocation1 + $0x38] sm:$0xff pattern:$0x73625140]
    %v373 = vmul.f32 %v266, %v357
    %v374 = vmul.f32 %v266, %v358
    %v375 = vmul.f32 %v266, %v359
    %v376 = vmul.f32 %v266, %v360
    %v377 = vmul.f32 %v266, %v361
    %v378 = vmul.f32 %v266, %v362
    %v379 = vmul.f32 %v266, %v363
    %v380 = vmul.f32 %v266, %v364
    %v381 = vsel %vm79, %v373, 0.0
    %v382 = vrot.slane %v381, 4
    %v383 = vadd.f32 %v381, %v382
    %v384 = vrot.slane %v383, 2
    %v385 = vadd.f32 %v383, %v384
    %v386 = vrot.slane %v385, 1
    %v387 = vadd.f32 %v385, %v386
    %v388 = vsel %vm79, %v374, 0.0
    %v389 = vrot.slane %v388, 4
    %v390 = vadd.f32 %v388, %v389
    %v391 = vrot.slane %v390, 2
    %v392 = vadd.f32 %v390, %v391
    %v393 = vrot.slane %v392, 1
    %v394 = vadd.f32 %v392, %v393
    %v395 = vsel %vm79, %v375, 0.0
    %v396 = vrot.slane %v395, 4
    %v397 = vadd.f32 %v395, %v396
    %v398 = vrot.slane %v397, 2
    %v399 = vadd.f32 %v397, %v398
    %v400 = vrot.slane %v399, 1
    %v401 = vadd.f32 %v399, %v400
    %v402 = vsel %vm79, %v376, 0.0
    %v403 = vrot.slane %v402, 4
    %v404 = vadd.f32 %v402, %v403
    %v405 = vrot.slane %v404, 2
    %v406 = vadd.f32 %v404, %v405
    %v407 = vrot.slane %v406, 1
    %v408 = vadd.f32 %v406, %v407
    %v409 = vsel %vm79, %v377, 0.0
    %v410 = vrot.slane %v409, 4
    %v411 = vadd.f32 %v409, %v410
    %v412 = vrot.slane %v411, 2
    %v413 = vadd.f32 %v411, %v412
    %v414 = vrot.slane %v413, 1
    %v415 = vadd.f32 %v413, %v414
    %v416 = vsel %vm79, %v378, 0.0
    %v417 = vrot.slane %v416, 4
    %v418 = vadd.f32 %v416, %v417
    %v419 = vrot.slane %v418, 2
    %v420 = vadd.f32 %v418, %v419
    %v421 = vrot.slane %v420, 1
    %v422 = vadd.f32 %v420, %v421
    %v423 = vsel %vm79, %v379, 0.0
    %v424 = vrot.slane %v423, 4
    %v425 = vadd.f32 %v423, %v424
    %v426 = vrot.slane %v425, 2
    %v427 = vadd.f32 %v425, %v426
    %v428 = vrot.slane %v427, 1
    %v429 = vadd.f32 %v427, %v428
    %v430 = vsel %vm79, %v380, 0.0
    %v431 = vrot.slane %v430, 4
    %v432 = vadd.f32 %v430, %v431
    %v433 = vrot.slane %v432, 2
    %v434 = vadd.f32 %v432, %v433
    %v435 = vrot.slane %v434, 1
    %v436 = vadd.f32 %v434, %v435
    %v437 = vadd.f32 %v302, %v387
    %v438 = vadd.f32 %v309, %v394
    %v439 = vadd.f32 %v316, %v401
    %v440 = vadd.f32 %v323, %v408
    %v441 = vadd.f32 %v330, %v415
    %v442 = vadd.f32 %v337, %v422
    %v443 = vadd.f32 %v344, %v429
    %v444 = vadd.f32 %v351, %v436
    %v445 = vsel %vm214, %v264, 0.0
    %446 = vadd.xlane.f32.xlu0 %v445
    %v447 = vpop.xlane.xlu0 %446
    %v448 = vrot.slane %v447, 4
    %v449 = vadd.f32 %v447, %v448
    %v450 = vrot.slane %v449, 2
    %v451 = vadd.f32 %v449, %v450
    %v452 = vrot.slane %v451, 1
    %v453 = vadd.f32 %v451, %v452
    %s454 = vtos %v453
    %v455 = vsel %vm214, %v266, 0.0
    %456 = vadd.xlane.f32.xlu0 %v455
    %v457 = vpop.xlane.xlu0 %456
    %v458 = vrot.slane %v457, 4
    %v459 = vadd.f32 %v457, %v458
    %v460 = vrot.slane %v459, 2
    %v461 = vadd.f32 %v459, %v460
    %v462 = vrot.slane %v461, 1
    %v463 = vadd.f32 %v461, %v462
    %s464 = vtos %v463
    %s465 = sadd.f32 %s454, %s464
    %v466 = vstv %s63
    %v467 = vmul.f32 %v466, %v437
    %v468 = vmul.f32 %v466, %v438
    %v469 = vmul.f32 %v466, %v439
    %v470 = vmul.f32 %v466, %v440
    %v471 = vmul.f32 %v466, %v441
    %v472 = vmul.f32 %v466, %v442
    %v473 = vmul.f32 %v466, %v443
    %v474 = vmul.f32 %v466, %v444
    %v483 = vrot.slane %v468, 7
    %v484 = vrot.slane %v469, 6
    %v485 = vrot.slane %v470, 5
    %v486 = vrot.slane %v471, 4
    %v487 = vrot.slane %v472, 3
    %v488 = vrot.slane %v473, 2
    %v489 = vrot.slane %v474, 1
    %vm490 = vcmask 1040384
    %v491 = vsel %vm490, %v467, %v483
    %vm492 = vcmask 1042434
    %v493 = vsel %vm492, %v484, %v485
    %v494 = vsel %vm79, %v491, %v493
    %vm495 = vcmask 1044484
    %v496 = vsel %vm495, %v486, %v487
    %vm497 = vcmask 1046534
    %v498 = vsel %vm497, %v488, %v489
    %v499 = vsel %vm81, %v496, %v498
    %v500 = vsel %vm83, %v494, %v499
    %v502 = vsub.f32 %v61, %v500
    %s503 = smul.f32 %s63, %s465
    %s504 = ssub.f32 %s62, %s503
    %505 = vst [vmem:[#allocation13] sm:$0xff] %v502
    %s506 = scalar_lea.smem [#allocation14], 0
    %507 = sst [smem:[%s506]] %s504
    %v509 = vperm.slane %v502, 0
    %v510 = vperm.slane %v502, 1
    %v511 = vperm.slane %v502, 2
    %v512 = vperm.slane %v502, 3
    %v513 = vperm.slane %v502, 4
    %v514 = vperm.slane %v502, 5
    %v515 = vperm.slane %v502, 6
    %v516 = vperm.slane %v502, 7
    %v517 = vrot.slane %v510, 6
    %v518 = vrot.slane %v511, 4
    %v519 = vrot.slane %v512, 2
    %v520 = vrot.slane %v514, 6
    %v521 = vrot.slane %v515, 4
    %v522 = vrot.slane %v516, 2
    %v523 = vsel %vm79, %v509, %v517
    %v524 = vsel %vm81, %v518, %v519
    %v525 = vsel %vm83, %v523, %v524
    %v526 = vsel %vm79, %v513, %v520
    %v527 = vsel %vm81, %v521, %v522
    %v528 = vsel %vm83, %v526, %v527
    %v531 = vmul.f32 %v57, %v525
    %v532 = vmul.f32 %v58, %v528
    %535 = vst [vmem:[#allocation1] ss:$4 sm:$0xff] %v531
    %s536 = scalar_lea.vmem [#allocation1], 32
    %537 = vst [vmem:[%s536] ss:$4 sm:$0xff] %v532
    %v538 = vld.sshfl [vmem:[#allocation1] sm:$0xff pattern:$0x73625140]
    %v539 = vld.sshfl [vmem:[#allocation1 + $0x8] sm:$0xff pattern:$0x73625140]
    %v540 = vld.sshfl [vmem:[#allocation1 + $0x10] sm:$0xff pattern:$0x73625140]
    %v541 = vld.sshfl [vmem:[#allocation1 + $0x18] sm:$0xff pattern:$0x73625140]
    %v542 = vld.sshfl [vmem:[#allocation1 + $0x20] sm:$0xff pattern:$0x73625140]
    %v543 = vld.sshfl [vmem:[#allocation1 + $0x28] sm:$0xff pattern:$0x73625140]
    %v544 = vld.sshfl [vmem:[#allocation1 + $0x30] sm:$0xff pattern:$0x73625140]
    %v545 = vld.sshfl [vmem:[#allocation1 + $0x38] sm:$0xff pattern:$0x73625140]
    %v554 = vsel %vm79, %v538, 0.0
    %v555 = vsel %vm79, %v539, 0.0
    %v556 = vadd.f32 %v554, %v555
    %v557 = vsel %vm79, %v540, 0.0
    %v558 = vadd.f32 %v556, %v557
    %v559 = vsel %vm79, %v541, 0.0
    %v560 = vadd.f32 %v558, %v559
    %v561 = vsel %vm79, %v542, 0.0
    %v562 = vadd.f32 %v560, %v561
    %v563 = vsel %vm79, %v543, 0.0
    %v564 = vadd.f32 %v562, %v563
    %v565 = vsel %vm79, %v544, 0.0
    %v566 = vadd.f32 %v564, %v565
    %v567 = vsel %vm79, %v545, 0.0
    %v568 = vadd.f32 %v566, %v567
    %569 = vadd.xlane.f32.xlu0 %v568
    %v570 = vpop.xlane.xlu0 %569
    %v571 = vstv %s504
    %v572 = vadd.f32 %v570, %v571
    %v573 = vxor.u32 %v572, 2147483648
    %v574 = vmul.f32 %v573, 1.442695
    %v575 = vpow.pop %v574
    %v576 = vadd.f32 %v575, 1.0
    %v577 = vrcp.pop %v576
    %v578 = vmul.f32 %v576, %v577
    %v579 = vsub.f32 1.0, %v578
    %v580 = vmul.f32 %v577, %v579
    %v581 = vadd.f32 %v577, %v580
    %vm582 = vweird.f32 %v576
    %vm583 = vweird.f32 %v577
    %vm584 = vmor %vm582, %vm583
    %v585 = vsel %vm584, %v577, %v581
    %v586 = vand.u32 2147483647, %v576
    %vm587 = vcmp.eq.f32.partialorder %v586, 8.507059e+37
    %v588 = vand.u32 %v576, 2147483648
    %v589 = vor.u32 1.1754944e-38, %v588
    %v590 = vsel %vm587, %v589, %v585
    %v591 = vmul.f32 1.0, %v590
    %v592 = vlog2.pop %v591
    %v593 = vmul.f32 %v592, 0.6931472
    %v594 = vmax.f32 %v593, -100.0
    %v595 = vsel %vm214, %v594, 0.0
    %596 = vadd.xlane.f32.xlu0 %v595
    %v597 = vpop.xlane.xlu0 %596
    %v598 = vrot.slane %v597, 4
    %v599 = vadd.f32 %v597, %v598
    %v600 = vrot.slane %v599, 2
    %v601 = vadd.f32 %v599, %v600
    %v602 = vrot.slane %v601, 1
    %v603 = vadd.f32 %v601, %v602
    %s604 = vtos %v603
    %v605 = vrcp.pop 2.0
    %v606 = vmul.f32 2.0, %v605
    %v607 = vsub.f32 1.0, %v606
    %v608 = vmul.f32 %v605, %v607
    %v609 = vadd.f32 %v605, %v608
    %vm610 = vweird.f32 %v605
    %v611 = vsel %vm610, %v605, %v609
    %s612 = vtos %v611
    %s613 = smul.f32 %s604, %s612
    %s614 = ssub.f32 0.0, %s613
    %s615 = scalar_lea.smem [#allocation11], 0
    %616 = sst [smem:[%s615]] %s614
    // Predicated region
    $region30: #{tpu_custom_call.1} parent=1 // pred_check
      _
    $region31: #{tpu_custom_call.1} parent=1 // pred_check_branch
      %618 = sbr.rel (0) target = $region33
    $region32: #{tpu_custom_call.1} parent=1 // pred_region
      %620 = vsyncadd [#allocation7], 0
      %s622 = sshll.u32 %s5, 4
      %s623 = int_to_ptr.hbm [resolvable:$true] %s622
      %625 = dma.smem_to_hbm [#allocation10], 16, %s623, [#allocation7]
    $region33: #{tpu_custom_call.1} parent=1 // pred_fallthru
      _
    // Predicated region
    $region34: #{tpu_custom_call.1} parent=1 // pred_check
      _
    $region35: #{tpu_custom_call.1} parent=1 // pred_check_branch
      %627 = sbr.rel (0) target = $region37
    $region36: #{tpu_custom_call.1} parent=1 // pred_region
      %629 = vsyncadd [#allocation12], 0
      %s631 = sshll.u32 %s6, 4
      %s632 = int_to_ptr.hbm [resolvable:$true] %s631
      %634 = dma.smem_to_hbm [#allocation11], 16, %s632, [#allocation12]
    $region37: #{tpu_custom_call.1} parent=1 // pred_fallthru
      _
    // Predicated region
    $region38: #{tpu_custom_call.1} parent=1 // pred_check
      _
    $region39: #{tpu_custom_call.1} parent=1 // pred_check_branch
      %636 = sbr.rel (0) target = $region41
    $region40: #{tpu_custom_call.1} parent=1 // pred_region
      %638 = vsyncadd [#allocation6], 0
      %s640 = sshll.u32 [#allocation13], 4
      %s641 = int_to_ptr.vmem [resolvable:$true] %s640
      %s642 = sshll.u32 %s7, 4
      %s643 = int_to_ptr.hbm [resolvable:$true] %s642
      %645 = dma.vmem_to_hbm [thread:$0]  %s641, 128, %s643, [#allocation6]
    $region41: #{tpu_custom_call.1} parent=1 // pred_fallthru
      _
    // Predicated region
    $region42: #{tpu_custom_call.1} parent=1 // pred_check
      _
    $region43: #{tpu_custom_call.1} parent=1 // pred_check_branch
      %647 = sbr.rel (0) target = $region45
    $region44: #{tpu_custom_call.1} parent=1 // pred_region
      %649 = vsyncadd [#allocation12], 0
      %s651 = sshll.u32 %s8, 4
      %s652 = int_to_ptr.hbm [resolvable:$true] %s651
      %654 = dma.smem_to_hbm [#allocation14], 16, %s652, [#allocation12]
    $region45: #{tpu_custom_call.1} parent=1 // pred_fallthru
      _
    // Predicated region
    $region46: #{tpu_custom_call.1} parent=1 // pred_check
      _
    $region47: #{tpu_custom_call.1} parent=1 // pred_check_branch
      %656 = sbr.rel (0) target = $region49
    $region48: #{tpu_custom_call.1} parent=1 // pred_region
      %658 = dma.done [#allocation7], 16
    $region49: #{tpu_custom_call.1} parent=1 // pred_fallthru
      _
    // Predicated region
    $region50: #{tpu_custom_call.1} parent=1 // pred_check
      _
    $region51: #{tpu_custom_call.1} parent=1 // pred_check_branch
      %660 = sbr.rel (0) target = $region53
    $region52: #{tpu_custom_call.1} parent=1 // pred_region
      %662 = dma.done [#allocation12], 16
    $region53: #{tpu_custom_call.1} parent=1 // pred_fallthru
      _
    // Predicated region
    $region54: #{tpu_custom_call.1} parent=1 // pred_check
      _
    $region55: #{tpu_custom_call.1} parent=1 // pred_check_branch
      %664 = sbr.rel (0) target = $region57
    $region56: #{tpu_custom_call.1} parent=1 // pred_region
      %666 = dma.done [#allocation6], 128
    $region57: #{tpu_custom_call.1} parent=1 // pred_fallthru
      _
    // Predicated region
    $region58: #{tpu_custom_call.1} parent=1 // pred_check
      _
    $region59: #{tpu_custom_call.1} parent=1 // pred_check_branch
      %668 = sbr.rel (0) target = $region61
    $region60: #{tpu_custom_call.1} parent=1 // pred_region
      %670 = dma.done [#allocation12], 16
    $region61: #{tpu_custom_call.1} parent=1 // pred_fallthru
      _
    %671 = sfence
    %672 = vsyncpa [#allocation5], 1
    %673 = vsyncpa [#allocation9], 1
    %674 = vsyncpa [#allocation6], 1
    %675 = vsyncpa [#allocation7], 1
    %676 = vsyncpa [#allocation12], 1

</llo_original>
